<compile_context>
chip_gen: v5e
topology: v5e:2x2
jax: 0.10.0
libtpu: 0.0.40
codegen_flags: <defaults>
</compile_context>

<pallas_src>
import jax
import jax.numpy as jnp
from jax import lax
from jax.experimental import pallas as pl
from jax.experimental.pallas import tpu as pltpu


def lstm_linear_kernel(x_ref, wih_ref, whh_ref, b_ref, wlin_ref, blin_ref,
                       out_ref, gx_scr, hs_scr):
    S, B, I = x_ref.shape
    H = whh_ref.shape[0]
    O = wlin_ref.shape[1]

    # ---- Hoisted input projection: one (S*B, I) @ (I, 4H) matmul + bias ----
    x_flat = x_ref[...].reshape(S * B, I)
    gx = jnp.dot(x_flat, wih_ref[...], preferred_element_type=jnp.float32)
    gx = gx + b_ref[...]                       # bias broadcast once, not per-step
    gx_scr[...] = gx.reshape(S, B, 4 * H)

    whh = whh_ref[...]                         # hoist weight load out of the loop

    # ---- Serial recurrence: only h @ Whh stays on the critical path ----
    def step(t, carry):
        h, c = carry
        gates = gx_scr[t] + jnp.dot(h, whh, preferred_element_type=jnp.float32)
        i_g = jax.nn.sigmoid(gates[:, 0 * H:1 * H])
        f_g = jax.nn.sigmoid(gates[:, 1 * H:2 * H])
        g_g = jnp.tanh(gates[:, 2 * H:3 * H])
        o_g = jax.nn.sigmoid(gates[:, 3 * H:4 * H])
        c_new = f_g * c + i_g * g_g
        h_new = o_g * jnp.tanh(c_new)
        hs_scr[t] = h_new
        return h_new, c_new

    h0 = jnp.zeros((B, H), jnp.float32)
    c0 = jnp.zeros((B, H), jnp.float32)
    lax.fori_loop(0, S, step, (h0, c0), unroll=True)

    # ---- Hoisted Linear head: one (S*B, H) @ (H, O) matmul, one output write ----
    hs = hs_scr[...].reshape(S * B, H)
    y = jnp.dot(hs, wlin_ref[...], preferred_element_type=jnp.float32) + blin_ref[...]
    out_ref[...] = y.reshape(S, B, O).astype(out_ref.dtype)


def lstm_rnn_forward(x, params):
    """x: (S, B, I) float32. Returns (S, B, O)."""
    S, B, I = x.shape
    wih_t = params["wih_t"]            # (I, 4H)
    whh_t = params["whh_t"]            # (H, 4H)
    b = params["b"]                    # (1, 4H) == b_ih + b_hh
    wlin_t = params["wlin_t"]          # (H, O)
    blin = params["blin"]              # (1, O)
    H = whh_t.shape[0]
    O = wlin_t.shape[1]

    vmem_spec = pl.BlockSpec(memory_space=pltpu.MemorySpace.VMEM)

    return pl.pallas_call(
        lstm_linear_kernel,
        out_shape=jax.ShapeDtypeStruct((S, B, O), jnp.float32),
        in_specs=[vmem_spec] * 6,
        out_specs=vmem_spec,
        scratch_shapes=[
            pltpu.VMEM((S, B, 4 * H), jnp.float32),   # precomputed x-gates
            pltpu.VMEM((S, B, H), jnp.float32),       # h_t history for the head
        ],
        compiler_params=pltpu.CompilerParams(
            vmem_limit_bytes=32 * 1024 * 1024,
        ),
    )(x, wih_t, whh_t, b, wlin_t, blin)


def init_params(key, input_size, hidden_size, output_size):
    """Deterministic parameter init (uniform, like PyTorch's default ranges)."""
    k = 1.0 / jnp.sqrt(jnp.float32(hidden_size))
    keys = jax.random.split(key, 6)
    w_ih = jax.random.uniform(keys[0], (4 * hidden_size, input_size),
                              jnp.float32, -k, k)
    w_hh = jax.random.uniform(keys[1], (4 * hidden_size, hidden_size),
                              jnp.float32, -k, k)
    b_ih = jax.random.uniform(keys[2], (4 * hidden_size,), jnp.float32, -k, k)
    b_hh = jax.random.uniform(keys[3], (4 * hidden_size,), jnp.float32, -k, k)
    w_lin = jax.random.uniform(keys[4], (output_size, hidden_size),
                               jnp.float32, -k, k)
    b_lin = jax.random.uniform(keys[5], (output_size,), jnp.float32, -k, k)
    return {
        "wih_t": w_ih.T,                               # (I, 4H)
        "whh_t": w_hh.T,                               # (H, 4H)
        "b": (b_ih + b_hh).reshape(1, -1),             # (1, 4H)
        "wlin_t": w_lin.T,                             # (H, O)
        "blin": b_lin.reshape(1, -1),                  # (1, O)
    }


def lstm_rnn_reference(x, params):
    """Pure-JAX reference (lax.scan) for validation."""
    H = params["whh_t"].shape[0]

    def step(carry, x_t):
        h, c = carry
        gates = x_t @ params["wih_t"] + h @ params["whh_t"] + params["b"]
        i_g = jax.nn.sigmoid(gates[:, 0 * H:1 * H])
        f_g = jax.nn.sigmoid(gates[:, 1 * H:2 * H])
        g_g = jnp.tanh(gates[:, 2 * H:3 * H])
        o_g = jax.nn.sigmoid(gates[:, 3 * H:4 * H])
        c_new = f_g * c + i_g * g_g
        h_new = o_g * jnp.tanh(c_new)
        return (h_new, c_new), h_new

    B = x.shape[1]
    h0 = jnp.zeros((B, H), jnp.float32)
    c0 = jnp.zeros((B, H), jnp.float32)
    _, hs = lax.scan(step, (h0, c0), x)                # (S, B, H)
    y = hs @ params["wlin_t"] + params["blin"]         # (S, B, O)
    return y


if __name__ == "__main__":
    SEQ, BATCH = 8, 2
    INPUT_SIZE, HIDDEN_SIZE, OUTPUT_SIZE = 4, 32, 8

    key = jax.random.PRNGKey(0)
    k_x, k_p = jax.random.split(key)
    x = jax.random.normal(k_x, (SEQ, BATCH, INPUT_SIZE), jnp.float32)
    params = init_params(k_p, INPUT_SIZE, HIDDEN_SIZE, OUTPUT_SIZE)

    out = lstm_rnn_forward(x, params)
    out = jax.block_until_ready(out)

    ref = jax.block_until_ready(lstm_rnn_reference(x, params))
    assert out.shape == (SEQ, BATCH, OUTPUT_SIZE)
    assert jnp.allclose(out, ref, atol=1e-5, rtol=1e-5), "mismatch vs reference"

    print("KERNEL_OK")
</pallas_src>

<mosaic_0001>
module attributes {stable_mosaic.version = 11 : i64} {
  func.func @lstm_linear_kernel(%arg0: memref<8x2x4xf32, #tpu.memory_space<vmem>>, %arg1: memref<4x128xf32, #tpu.memory_space<vmem>>, %arg2: memref<32x128xf32, #tpu.memory_space<vmem>>, %arg3: memref<1x128xf32, #tpu.memory_space<vmem>>, %arg4: memref<32x8xf32, #tpu.memory_space<vmem>>, %arg5: memref<1x8xf32, #tpu.memory_space<vmem>>, %arg6: memref<8x2x8xf32, #tpu.memory_space<vmem>>, %arg7: memref<8x2x128xf32, #tpu.memory_space<vmem>>, %arg8: memref<8x2x32xf32, #tpu.memory_space<vmem>>) attributes {dimension_semantics = [], scalar_prefetch = 0 : i64, scratch_operands = 2 : i64, tpu.core_type = #tpu.core_type<tc>} {
    %c0 = arith.constant 0 : index
    %c0_0 = arith.constant 0 : index
    %c0_1 = arith.constant 0 : index
    %0 = vector.load %arg0[%c0, %c0_0, %c0_1] : memref<8x2x4xf32, #tpu.memory_space<vmem>>, vector<8x2x4xf32>
    %1 = vector.shape_cast %0 : vector<8x2x4xf32> to vector<16x4xf32>
    %c0_2 = arith.constant 0 : index
    %c0_3 = arith.constant 0 : index
    %2 = vector.load %arg1[%c0_2, %c0_3] : memref<4x128xf32, #tpu.memory_space<vmem>>, vector<4x128xf32>
    %cst = arith.constant dense<0.000000e+00> : vector<16x128xf32>
    %3 = tpu.matmul %1, %2, %cst {dimension_numbers = #tpu.dot_dimension_numbers<[1], [0], [0], [1], [0, 0, 1, 1], [], []>} : vector<16x4xf32>, vector<4x128xf32>, vector<16x128xf32> -> vector<16x128xf32>
    %c0_4 = arith.constant 0 : index
    %c0_5 = arith.constant 0 : index
    %4 = vector.load %arg3[%c0_4, %c0_5] : memref<1x128xf32, #tpu.memory_space<vmem>>, vector<1x128xf32>
    %5 = vector.broadcast %4 : vector<1x128xf32> to vector<16x128xf32>
    %6 = arith.addf %3, %5 : vector<16x128xf32>
    %7 = vector.shape_cast %6 : vector<16x128xf32> to vector<8x2x128xf32>
    %c0_6 = arith.constant 0 : index
    %c0_7 = arith.constant 0 : index
    %c0_8 = arith.constant 0 : index
    %8 = vector.load %arg7[%c0_6, %c0_7, %c0_8] : memref<8x2x128xf32, #tpu.memory_space<vmem>>, vector<8x2x128xf32>
    tpu.vector_store %arg7[%c0_6, %c0_7, %c0_8], %7 {strides = array<i32>} : memref<8x2x128xf32, #tpu.memory_space<vmem>>, vector<8x2x128xf32>,
    %c0_9 = arith.constant 0 : index
    %c0_10 = arith.constant 0 : index
    %9 = vector.load %arg2[%c0_9, %c0_10] : memref<32x128xf32, #tpu.memory_space<vmem>>, vector<32x128xf32>
    %cst_11 = arith.constant 0.000000e+00 : f32
    %10 = vector.broadcast %cst_11 : f32 to vector<2x32xf32>
    %cst_12 = arith.constant 0.000000e+00 : f32
    %11 = vector.broadcast %cst_12 : f32 to vector<2x32xf32>
    %c0_i32 = arith.constant 0 : i32
    %12 = arith.index_cast %c0_i32 : i32 to index
    %c0_13 = arith.constant 0 : index
    %c0_14 = arith.constant 0 : index
    %13 = vector.load %arg7[%12, %c0_13, %c0_14] : memref<8x2x128xf32, #tpu.memory_space<vmem>>, vector<1x2x128xf32>
    %14 = vector.shape_cast %13 : vector<1x2x128xf32> to vector<2x128xf32>
    %cst_15 = arith.constant dense<0.000000e+00> : vector<2x128xf32>
    %15 = tpu.matmul %10, %9, %cst_15 {dimension_numbers = #tpu.dot_dimension_numbers<[1], [0], [0], [1], [0, 0, 1, 1], [], []>} : vector<2x32xf32>, vector<32x128xf32>, vector<2x128xf32> -> vector<2x128xf32>
    %16 = arith.addf %14, %15 : vector<2x128xf32>
    %17 = vector.extract_strided_slice %16 {offsets = [0, 0], sizes = [2, 32], strides = [1, 1]} : vector<2x128xf32> to vector<2x32xf32>
    %18 = arith.negf %17 : vector<2x32xf32>
    %19 = math.exp %18 : vector<2x32xf32>
    %cst_16 = arith.constant 1.000000e+00 : f32
    %20 = vector.broadcast %cst_16 : f32 to vector<2x32xf32>
    %21 = arith.addf %20, %19 : vector<2x32xf32>
    %22 = arith.divf %20, %21 : vector<2x32xf32>
    %23 = vector.extract_strided_slice %16 {offsets = [0, 32], sizes = [2, 32], strides = [1, 1]} : vector<2x128xf32> to vector<2x32xf32>
    %24 = arith.negf %23 : vector<2x32xf32>
    %25 = math.exp %24 : vector<2x32xf32>
    %cst_17 = arith.constant 1.000000e+00 : f32
    %26 = vector.broadcast %cst_17 : f32 to vector<2x32xf32>
    %27 = arith.addf %26, %25 : vector<2x32xf32>
    %28 = arith.divf %26, %27 : vector<2x32xf32>
    %29 = vector.extract_strided_slice %16 {offsets = [0, 64], sizes = [2, 32], strides = [1, 1]} : vector<2x128xf32> to vector<2x32xf32>
    %30 = math.tanh %29 : vector<2x32xf32>
    %31 = vector.extract_strided_slice %16 {offsets = [0, 96], sizes = [2, 32], strides = [1, 1]} : vector<2x128xf32> to vector<2x32xf32>
    %32 = arith.negf %31 : vector<2x32xf32>
    %33 = math.exp %32 : vector<2x32xf32>
    %cst_18 = arith.constant 1.000000e+00 : f32
    %34 = vector.broadcast %cst_18 : f32 to vector<2x32xf32>
    %35 = arith.addf %34, %33 : vector<2x32xf32>
    %36 = arith.divf %34, %35 : vector<2x32xf32>
    %37 = arith.mulf %28, %11 : vector<2x32xf32>
    %38 = arith.mulf %22, %30 : vector<2x32xf32>
    %39 = arith.addf %37, %38 : vector<2x32xf32>
    %40 = math.tanh %39 : vector<2x32xf32>
    %41 = arith.mulf %36, %40 : vector<2x32xf32>
    %42 = arith.index_cast %c0_i32 : i32 to index
    %c0_19 = arith.constant 0 : index
    %c0_20 = arith.constant 0 : index
    %43 = vector.load %arg8[%42, %c0_19, %c0_20] : memref<8x2x32xf32, #tpu.memory_space<vmem>>, vector<1x2x32xf32>
    %44 = vector.shape_cast %43 : vector<1x2x32xf32> to vector<2x32xf32>
    %45 = vector.shape_cast %41 : vector<2x32xf32> to vector<1x2x32xf32>
    tpu.vector_store %arg8[%42, %c0_19, %c0_20], %45 {strides = array<i32>} : memref<8x2x32xf32, #tpu.memory_space<vmem>>, vector<1x2x32xf32>,
    %c1_i32 = arith.constant 1 : i32
    %46 = arith.index_cast %c1_i32 : i32 to index
    %c0_21 = arith.constant 0 : index
    %c0_22 = arith.constant 0 : index
    %47 = vector.load %arg7[%46, %c0_21, %c0_22] : memref<8x2x128xf32, #tpu.memory_space<vmem>>, vector<1x2x128xf32>
    %48 = vector.shape_cast %47 : vector<1x2x128xf32> to vector<2x128xf32>
    %cst_23 = arith.constant dense<0.000000e+00> : vector<2x128xf32>
    %49 = tpu.matmul %41, %9, %cst_23 {dimension_numbers = #tpu.dot_dimension_numbers<[1], [0], [0], [1], [0, 0, 1, 1], [], []>} : vector<2x32xf32>, vector<32x128xf32>, vector<2x128xf32> -> vector<2x128xf32>
    %50 = arith.addf %48, %49 : vector<2x128xf32>
    %51 = vector.extract_strided_slice %50 {offsets = [0, 0], sizes = [2, 32], strides = [1, 1]} : vector<2x128xf32> to vector<2x32xf32>
    %52 = arith.negf %51 : vector<2x32xf32>
    %53 = math.exp %52 : vector<2x32xf32>
    %cst_24 = arith.constant 1.000000e+00 : f32
    %54 = vector.broadcast %cst_24 : f32 to vector<2x32xf32>
    %55 = arith.addf %54, %53 : vector<2x32xf32>
    %56 = arith.divf %54, %55 : vector<2x32xf32>
    %57 = vector.extract_strided_slice %50 {offsets = [0, 32], sizes = [2, 32], strides = [1, 1]} : vector<2x128xf32> to vector<2x32xf32>
    %58 = arith.negf %57 : vector<2x32xf32>
    %59 = math.exp %58 : vector<2x32xf32>
    %cst_25 = arith.constant 1.000000e+00 : f32
    %60 = vector.broadcast %cst_25 : f32 to vector<2x32xf32>
    %61 = arith.addf %60, %59 : vector<2x32xf32>
    %62 = arith.divf %60, %61 : vector<2x32xf32>
    %63 = vector.extract_strided_slice %50 {offsets = [0, 64], sizes = [2, 32], strides = [1, 1]} : vector<2x128xf32> to vector<2x32xf32>
    %64 = math.tanh %63 : vector<2x32xf32>
    %65 = vector.extract_strided_slice %50 {offsets = [0, 96], sizes = [2, 32], strides = [1, 1]} : vector<2x128xf32> to vector<2x32xf32>
    %66 = arith.negf %65 : vector<2x32xf32>
    %67 = math.exp %66 : vector<2x32xf32>
    %cst_26 = arith.constant 1.000000e+00 : f32
    %68 = vector.broadcast %cst_26 : f32 to vector<2x32xf32>
    %69 = arith.addf %68, %67 : vector<2x32xf32>
    %70 = arith.divf %68, %69 : vector<2x32xf32>
    %71 = arith.mulf %62, %39 : vector<2x32xf32>
    %72 = arith.mulf %56, %64 : vector<2x32xf32>
    %73 = arith.addf %71, %72 : vector<2x32xf32>
    %74 = math.tanh %73 : vector<2x32xf32>
    %75 = arith.mulf %70, %74 : vector<2x32xf32>
    %76 = arith.index_cast %c1_i32 : i32 to index
    %c0_27 = arith.constant 0 : index
    %c0_28 = arith.constant 0 : index
    %77 = vector.load %arg8[%76, %c0_27, %c0_28] : memref<8x2x32xf32, #tpu.memory_space<vmem>>, vector<1x2x32xf32>
    %78 = vector.shape_cast %77 : vector<1x2x32xf32> to vector<2x32xf32>
    %79 = vector.shape_cast %75 : vector<2x32xf32> to vector<1x2x32xf32>
    tpu.vector_store %arg8[%76, %c0_27, %c0_28], %79 {strides = array<i32>} : memref<8x2x32xf32, #tpu.memory_space<vmem>>, vector<1x2x32xf32>,
    %c2_i32 = arith.constant 2 : i32
    %80 = arith.index_cast %c2_i32 : i32 to index
    %c0_29 = arith.constant 0 : index
    %c0_30 = arith.constant 0 : index
    %81 = vector.load %arg7[%80, %c0_29, %c0_30] : memref<8x2x128xf32, #tpu.memory_space<vmem>>, vector<1x2x128xf32>
    %82 = vector.shape_cast %81 : vector<1x2x128xf32> to vector<2x128xf32>
    %cst_31 = arith.constant dense<0.000000e+00> : vector<2x128xf32>
    %83 = tpu.matmul %75, %9, %cst_31 {dimension_numbers = #tpu.dot_dimension_numbers<[1], [0], [0], [1], [0, 0, 1, 1], [], []>} : vector<2x32xf32>, vector<32x128xf32>, vector<2x128xf32> -> vector<2x128xf32>
    %84 = arith.addf %82, %83 : vector<2x128xf32>
    %85 = vector.extract_strided_slice %84 {offsets = [0, 0], sizes = [2, 32], strides = [1, 1]} : vector<2x128xf32> to vector<2x32xf32>
    %86 = arith.negf %85 : vector<2x32xf32>
    %87 = math.exp %86 : vector<2x32xf32>
    %cst_32 = arith.constant 1.000000e+00 : f32
    %88 = vector.broadcast %cst_32 : f32 to vector<2x32xf32>
    %89 = arith.addf %88, %87 : vector<2x32xf32>
    %90 = arith.divf %88, %89 : vector<2x32xf32>
    %91 = vector.extract_strided_slice %84 {offsets = [0, 32], sizes = [2, 32], strides = [1, 1]} : vector<2x128xf32> to vector<2x32xf32>
    %92 = arith.negf %91 : vector<2x32xf32>
    %93 = math.exp %92 : vector<2x32xf32>
    %cst_33 = arith.constant 1.000000e+00 : f32
    %94 = vector.broadcast %cst_33 : f32 to vector<2x32xf32>
    %95 = arith.addf %94, %93 : vector<2x32xf32>
    %96 = arith.divf %94, %95 : vector<2x32xf32>
    %97 = vector.extract_strided_slice %84 {offsets = [0, 64], sizes = [2, 32], strides = [1, 1]} : vector<2x128xf32> to vector<2x32xf32>
    %98 = math.tanh %97 : vector<2x32xf32>
    %99 = vector.extract_strided_slice %84 {offsets = [0, 96], sizes = [2, 32], strides = [1, 1]} : vector<2x128xf32> to vector<2x32xf32>
    %100 = arith.negf %99 : vector<2x32xf32>
    %101 = math.exp %100 : vector<2x32xf32>
    %cst_34 = arith.constant 1.000000e+00 : f32
    %102 = vector.broadcast %cst_34 : f32 to vector<2x32xf32>
    %103 = arith.addf %102, %101 : vector<2x32xf32>
    %104 = arith.divf %102, %103 : vector<2x32xf32>
    %105 = arith.mulf %96, %73 : vector<2x32xf32>
    %106 = arith.mulf %90, %98 : vector<2x32xf32>
    %107 = arith.addf %105, %106 : vector<2x32xf32>
    %108 = math.tanh %107 : vector<2x32xf32>
    %109 = arith.mulf %104, %108 : vector<2x32xf32>
    %110 = arith.index_cast %c2_i32 : i32 to index
    %c0_35 = arith.constant 0 : index
    %c0_36 = arith.constant 0 : index
    %111 = vector.load %arg8[%110, %c0_35, %c0_36] : memref<8x2x32xf32, #tpu.memory_space<vmem>>, vector<1x2x32xf32>
    %112 = vector.shape_cast %111 : vector<1x2x32xf32> to vector<2x32xf32>
    %113 = vector.shape_cast %109 : vector<2x32xf32> to vector<1x2x32xf32>
    tpu.vector_store %arg8[%110, %c0_35, %c0_36], %113 {strides = array<i32>} : memref<8x2x32xf32, #tpu.memory_space<vmem>>, vector<1x2x32xf32>,
    %c3_i32 = arith.constant 3 : i32
    %114 = arith.index_cast %c3_i32 : i32 to index
    %c0_37 = arith.constant 0 : index
    %c0_38 = arith.constant 0 : index
    %115 = vector.load %arg7[%114, %c0_37, %c0_38] : memref<8x2x128xf32, #tpu.memory_space<vmem>>, vector<1x2x128xf32>
    %116 = vector.shape_cast %115 : vector<1x2x128xf32> to vector<2x128xf32>
    %cst_39 = arith.constant dense<0.000000e+00> : vector<2x128xf32>
    %117 = tpu.matmul %109, %9, %cst_39 {dimension_numbers = #tpu.dot_dimension_numbers<[1], [0], [0], [1], [0, 0, 1, 1], [], []>} : vector<2x32xf32>, vector<32x128xf32>, vector<2x128xf32> -> vector<2x128xf32>
    %118 = arith.addf %116, %117 : vector<2x128xf32>
    %119 = vector.extract_strided_slice %118 {offsets = [0, 0], sizes = [2, 32], strides = [1, 1]} : vector<2x128xf32> to vector<2x32xf32>
    %120 = arith.negf %119 : vector<2x32xf32>
    %121 = math.exp %120 : vector<2x32xf32>
    %cst_40 = arith.constant 1.000000e+00 : f32
    %122 = vector.broadcast %cst_40 : f32 to vector<2x32xf32>
    %123 = arith.addf %122, %121 : vector<2x32xf32>
    %124 = arith.divf %122, %123 : vector<2x32xf32>
    %125 = vector.extract_strided_slice %118 {offsets = [0, 32], sizes = [2, 32], strides = [1, 1]} : vector<2x128xf32> to vector<2x32xf32>
    %126 = arith.negf %125 : vector<2x32xf32>
    %127 = math.exp %126 : vector<2x32xf32>
    %cst_41 = arith.constant 1.000000e+00 : f32
    %128 = vector.broadcast %cst_41 : f32 to vector<2x32xf32>
    %129 = arith.addf %128, %127 : vector<2x32xf32>
    %130 = arith.divf %128, %129 : vector<2x32xf32>
    %131 = vector.extract_strided_slice %118 {offsets = [0, 64], sizes = [2, 32], strides = [1, 1]} : vector<2x128xf32> to vector<2x32xf32>
    %132 = math.tanh %131 : vector<2x32xf32>
    %133 = vector.extract_strided_slice %118 {offsets = [0, 96], sizes = [2, 32], strides = [1, 1]} : vector<2x128xf32> to vector<2x32xf32>
    %134 = arith.negf %133 : vector<2x32xf32>
    %135 = math.exp %134 : vector<2x32xf32>
    %cst_42 = arith.constant 1.000000e+00 : f32
    %136 = vector.broadcast %cst_42 : f32 to vector<2x32xf32>
    %137 = arith.addf %136, %135 : vector<2x32xf32>
    %138 = arith.divf %136, %137 : vector<2x32xf32>
    %139 = arith.mulf %130, %107 : vector<2x32xf32>
    %140 = arith.mulf %124, %132 : vector<2x32xf32>
    %141 = arith.addf %139, %140 : vector<2x32xf32>
    %142 = math.tanh %141 : vector<2x32xf32>
    %143 = arith.mulf %138, %142 : vector<2x32xf32>
    %144 = arith.index_cast %c3_i32 : i32 to index
    %c0_43 = arith.constant 0 : index
    %c0_44 = arith.constant 0 : index
    %145 = vector.load %arg8[%144, %c0_43, %c0_44] : memref<8x2x32xf32, #tpu.memory_space<vmem>>, vector<1x2x32xf32>
    %146 = vector.shape_cast %145 : vector<1x2x32xf32> to vector<2x32xf32>
    %147 = vector.shape_cast %143 : vector<2x32xf32> to vector<1x2x32xf32>
    tpu.vector_store %arg8[%144, %c0_43, %c0_44], %147 {strides = array<i32>} : memref<8x2x32xf32, #tpu.memory_space<vmem>>, vector<1x2x32xf32>,
    %c4_i32 = arith.constant 4 : i32
    %148 = arith.index_cast %c4_i32 : i32 to index
    %c0_45 = arith.constant 0 : index
    %c0_46 = arith.constant 0 : index
    %149 = vector.load %arg7[%148, %c0_45, %c0_46] : memref<8x2x128xf32, #tpu.memory_space<vmem>>, vector<1x2x128xf32>
    %150 = vector.shape_cast %149 : vector<1x2x128xf32> to vector<2x128xf32>
    %cst_47 = arith.constant dense<0.000000e+00> : vector<2x128xf32>
    %151 = tpu.matmul %143, %9, %cst_47 {dimension_numbers = #tpu.dot_dimension_numbers<[1], [0], [0], [1], [0, 0, 1, 1], [], []>} : vector<2x32xf32>, vector<32x128xf32>, vector<2x128xf32> -> vector<2x128xf32>
    %152 = arith.addf %150, %151 : vector<2x128xf32>
    %153 = vector.extract_strided_slice %152 {offsets = [0, 0], sizes = [2, 32], strides = [1, 1]} : vector<2x128xf32> to vector<2x32xf32>
    %154 = arith.negf %153 : vector<2x32xf32>
    %155 = math.exp %154 : vector<2x32xf32>
    %cst_48 = arith.constant 1.000000e+00 : f32
    %156 = vector.broadcast %cst_48 : f32 to vector<2x32xf32>
    %157 = arith.addf %156, %155 : vector<2x32xf32>
    %158 = arith.divf %156, %157 : vector<2x32xf32>
    %159 = vector.extract_strided_slice %152 {offsets = [0, 32], sizes = [2, 32], strides = [1, 1]} : vector<2x128xf32> to vector<2x32xf32>
    %160 = arith.negf %159 : vector<2x32xf32>
    %161 = math.exp %160 : vector<2x32xf32>
    %cst_49 = arith.constant 1.000000e+00 : f32
    %162 = vector.broadcast %cst_49 : f32 to vector<2x32xf32>
    %163 = arith.addf %162, %161 : vector<2x32xf32>
    %164 = arith.divf %162, %163 : vector<2x32xf32>
    %165 = vector.extract_strided_slice %152 {offsets = [0, 64], sizes = [2, 32], strides = [1, 1]} : vector<2x128xf32> to vector<2x32xf32>
    %166 = math.tanh %165 : vector<2x32xf32>
    %167 = vector.extract_strided_slice %152 {offsets = [0, 96], sizes = [2, 32], strides = [1, 1]} : vector<2x128xf32> to vector<2x32xf32>
    %168 = arith.negf %167 : vector<2x32xf32>
    %169 = math.exp %168 : vector<2x32xf32>
    %cst_50 = arith.constant 1.000000e+00 : f32
    %170 = vector.broadcast %cst_50 : f32 to vector<2x32xf32>
    %171 = arith.addf %170, %169 : vector<2x32xf32>
    %172 = arith.divf %170, %171 : vector<2x32xf32>
    %173 = arith.mulf %164, %141 : vector<2x32xf32>
    %174 = arith.mulf %158, %166 : vector<2x32xf32>
    %175 = arith.addf %173, %174 : vector<2x32xf32>
    %176 = math.tanh %175 : vector<2x32xf32>
    %177 = arith.mulf %172, %176 : vector<2x32xf32>
    %178 = arith.index_cast %c4_i32 : i32 to index
    %c0_51 = arith.constant 0 : index
    %c0_52 = arith.constant 0 : index
    %179 = vector.load %arg8[%178, %c0_51, %c0_52] : memref<8x2x32xf32, #tpu.memory_space<vmem>>, vector<1x2x32xf32>
    %180 = vector.shape_cast %179 : vector<1x2x32xf32> to vector<2x32xf32>
    %181 = vector.shape_cast %177 : vector<2x32xf32> to vector<1x2x32xf32>
    tpu.vector_store %arg8[%178, %c0_51, %c0_52], %181 {strides = array<i32>} : memref<8x2x32xf32, #tpu.memory_space<vmem>>, vector<1x2x32xf32>,
    %c5_i32 = arith.constant 5 : i32
    %182 = arith.index_cast %c5_i32 : i32 to index
    %c0_53 = arith.constant 0 : index
    %c0_54 = arith.constant 0 : index
    %183 = vector.load %arg7[%182, %c0_53, %c0_54] : memref<8x2x128xf32, #tpu.memory_space<vmem>>, vector<1x2x128xf32>
    %184 = vector.shape_cast %183 : vector<1x2x128xf32> to vector<2x128xf32>
    %cst_55 = arith.constant dense<0.000000e+00> : vector<2x128xf32>
    %185 = tpu.matmul %177, %9, %cst_55 {dimension_numbers = #tpu.dot_dimension_numbers<[1], [0], [0], [1], [0, 0, 1, 1], [], []>} : vector<2x32xf32>, vector<32x128xf32>, vector<2x128xf32> -> vector<2x128xf32>
    %186 = arith.addf %184, %185 : vector<2x128xf32>
    %187 = vector.extract_strided_slice %186 {offsets = [0, 0], sizes = [2, 32], strides = [1, 1]} : vector<2x128xf32> to vector<2x32xf32>
    %188 = arith.negf %187 : vector<2x32xf32>
    %189 = math.exp %188 : vector<2x32xf32>
    %cst_56 = arith.constant 1.000000e+00 : f32
    %190 = vector.broadcast %cst_56 : f32 to vector<2x32xf32>
    %191 = arith.addf %190, %189 : vector<2x32xf32>
    %192 = arith.divf %190, %191 : vector<2x32xf32>
    %193 = vector.extract_strided_slice %186 {offsets = [0, 32], sizes = [2, 32], strides = [1, 1]} : vector<2x128xf32> to vector<2x32xf32>
    %194 = arith.negf %193 : vector<2x32xf32>
    %195 = math.exp %194 : vector<2x32xf32>
    %cst_57 = arith.constant 1.000000e+00 : f32
    %196 = vector.broadcast %cst_57 : f32 to vector<2x32xf32>
    %197 = arith.addf %196, %195 : vector<2x32xf32>
    %198 = arith.divf %196, %197 : vector<2x32xf32>
    %199 = vector.extract_strided_slice %186 {offsets = [0, 64], sizes = [2, 32], strides = [1, 1]} : vector<2x128xf32> to vector<2x32xf32>
    %200 = math.tanh %199 : vector<2x32xf32>
    %201 = vector.extract_strided_slice %186 {offsets = [0, 96], sizes = [2, 32], strides = [1, 1]} : vector<2x128xf32> to vector<2x32xf32>
    %202 = arith.negf %201 : vector<2x32xf32>
    %203 = math.exp %202 : vector<2x32xf32>
    %cst_58 = arith.constant 1.000000e+00 : f32
    %204 = vector.broadcast %cst_58 : f32 to vector<2x32xf32>
    %205 = arith.addf %204, %203 : vector<2x32xf32>
    %206 = arith.divf %204, %205 : vector<2x32xf32>
    %207 = arith.mulf %198, %175 : vector<2x32xf32>
    %208 = arith.mulf %192, %200 : vector<2x32xf32>
    %209 = arith.addf %207, %208 : vector<2x32xf32>
    %210 = math.tanh %209 : vector<2x32xf32>
    %211 = arith.mulf %206, %210 : vector<2x32xf32>
    %212 = arith.index_cast %c5_i32 : i32 to index
    %c0_59 = arith.constant 0 : index
    %c0_60 = arith.constant 0 : index
    %213 = vector.load %arg8[%212, %c0_59, %c0_60] : memref<8x2x32xf32, #tpu.memory_space<vmem>>, vector<1x2x32xf32>
    %214 = vector.shape_cast %213 : vector<1x2x32xf32> to vector<2x32xf32>
    %215 = vector.shape_cast %211 : vector<2x32xf32> to vector<1x2x32xf32>
    tpu.vector_store %arg8[%212, %c0_59, %c0_60], %215 {strides = array<i32>} : memref<8x2x32xf32, #tpu.memory_space<vmem>>, vector<1x2x32xf32>,
    %c6_i32 = arith.constant 6 : i32
    %216 = arith.index_cast %c6_i32 : i32 to index
    %c0_61 = arith.constant 0 : index
    %c0_62 = arith.constant 0 : index
    %217 = vector.load %arg7[%216, %c0_61, %c0_62] : memref<8x2x128xf32, #tpu.memory_space<vmem>>, vector<1x2x128xf32>
    %218 = vector.shape_cast %217 : vector<1x2x128xf32> to vector<2x128xf32>
    %cst_63 = arith.constant dense<0.000000e+00> : vector<2x128xf32>
    %219 = tpu.matmul %211, %9, %cst_63 {dimension_numbers = #tpu.dot_dimension_numbers<[1], [0], [0], [1], [0, 0, 1, 1], [], []>} : vector<2x32xf32>, vector<32x128xf32>, vector<2x128xf32> -> vector<2x128xf32>
    %220 = arith.addf %218, %219 : vector<2x128xf32>
    %221 = vector.extract_strided_slice %220 {offsets = [0, 0], sizes = [2, 32], strides = [1, 1]} : vector<2x128xf32> to vector<2x32xf32>
    %222 = arith.negf %221 : vector<2x32xf32>
    %223 = math.exp %222 : vector<2x32xf32>
    %cst_64 = arith.constant 1.000000e+00 : f32
    %224 = vector.broadcast %cst_64 : f32 to vector<2x32xf32>
    %225 = arith.addf %224, %223 : vector<2x32xf32>
    %226 = arith.divf %224, %225 : vector<2x32xf32>
    %227 = vector.extract_strided_slice %220 {offsets = [0, 32], sizes = [2, 32], strides = [1, 1]} : vector<2x128xf32> to vector<2x32xf32>
    %228 = arith.negf %227 : vector<2x32xf32>
    %229 = math.exp %228 : vector<2x32xf32>
    %cst_65 = arith.constant 1.000000e+00 : f32
    %230 = vector.broadcast %cst_65 : f32 to vector<2x32xf32>
    %231 = arith.addf %230, %229 : vector<2x32xf32>
    %232 = arith.divf %230, %231 : vector<2x32xf32>
    %233 = vector.extract_strided_slice %220 {offsets = [0, 64], sizes = [2, 32], strides = [1, 1]} : vector<2x128xf32> to vector<2x32xf32>
    %234 = math.tanh %233 : vector<2x32xf32>
    %235 = vector.extract_strided_slice %220 {offsets = [0, 96], sizes = [2, 32], strides = [1, 1]} : vector<2x128xf32> to vector<2x32xf32>
    %236 = arith.negf %235 : vector<2x32xf32>
    %237 = math.exp %236 : vector<2x32xf32>
    %cst_66 = arith.constant 1.000000e+00 : f32
    %238 = vector.broadcast %cst_66 : f32 to vector<2x32xf32>
    %239 = arith.addf %238, %237 : vector<2x32xf32>
    %240 = arith.divf %238, %239 : vector<2x32xf32>
    %241 = arith.mulf %232, %209 : vector<2x32xf32>
    %242 = arith.mulf %226, %234 : vector<2x32xf32>
    %243 = arith.addf %241, %242 : vector<2x32xf32>
    %244 = math.tanh %243 : vector<2x32xf32>
    %245 = arith.mulf %240, %244 : vector<2x32xf32>
    %246 = arith.index_cast %c6_i32 : i32 to index
    %c0_67 = arith.constant 0 : index
    %c0_68 = arith.constant 0 : index
    %247 = vector.load %arg8[%246, %c0_67, %c0_68] : memref<8x2x32xf32, #tpu.memory_space<vmem>>, vector<1x2x32xf32>
    %248 = vector.shape_cast %247 : vector<1x2x32xf32> to vector<2x32xf32>
    %249 = vector.shape_cast %245 : vector<2x32xf32> to vector<1x2x32xf32>
    tpu.vector_store %arg8[%246, %c0_67, %c0_68], %249 {strides = array<i32>} : memref<8x2x32xf32, #tpu.memory_space<vmem>>, vector<1x2x32xf32>,
    %c7_i32 = arith.constant 7 : i32
    %250 = arith.index_cast %c7_i32 : i32 to index
    %c0_69 = arith.constant 0 : index
    %c0_70 = arith.constant 0 : index
    %251 = vector.load %arg7[%250, %c0_69, %c0_70] : memref<8x2x128xf32, #tpu.memory_space<vmem>>, vector<1x2x128xf32>
    %252 = vector.shape_cast %251 : vector<1x2x128xf32> to vector<2x128xf32>
    %cst_71 = arith.constant dense<0.000000e+00> : vector<2x128xf32>
    %253 = tpu.matmul %245, %9, %cst_71 {dimension_numbers = #tpu.dot_dimension_numbers<[1], [0], [0], [1], [0, 0, 1, 1], [], []>} : vector<2x32xf32>, vector<32x128xf32>, vector<2x128xf32> -> vector<2x128xf32>
    %254 = arith.addf %252, %253 : vector<2x128xf32>
    %255 = vector.extract_strided_slice %254 {offsets = [0, 0], sizes = [2, 32], strides = [1, 1]} : vector<2x128xf32> to vector<2x32xf32>
    %256 = arith.negf %255 : vector<2x32xf32>
    %257 = math.exp %256 : vector<2x32xf32>
    %cst_72 = arith.constant 1.000000e+00 : f32
    %258 = vector.broadcast %cst_72 : f32 to vector<2x32xf32>
    %259 = arith.addf %258, %257 : vector<2x32xf32>
    %260 = arith.divf %258, %259 : vector<2x32xf32>
    %261 = vector.extract_strided_slice %254 {offsets = [0, 32], sizes = [2, 32], strides = [1, 1]} : vector<2x128xf32> to vector<2x32xf32>
    %262 = arith.negf %261 : vector<2x32xf32>
    %263 = math.exp %262 : vector<2x32xf32>
    %cst_73 = arith.constant 1.000000e+00 : f32
    %264 = vector.broadcast %cst_73 : f32 to vector<2x32xf32>
    %265 = arith.addf %264, %263 : vector<2x32xf32>
    %266 = arith.divf %264, %265 : vector<2x32xf32>
    %267 = vector.extract_strided_slice %254 {offsets = [0, 64], sizes = [2, 32], strides = [1, 1]} : vector<2x128xf32> to vector<2x32xf32>
    %268 = math.tanh %267 : vector<2x32xf32>
    %269 = vector.extract_strided_slice %254 {offsets = [0, 96], sizes = [2, 32], strides = [1, 1]} : vector<2x128xf32> to vector<2x32xf32>
    %270 = arith.negf %269 : vector<2x32xf32>
    %271 = math.exp %270 : vector<2x32xf32>
    %cst_74 = arith.constant 1.000000e+00 : f32
    %272 = vector.broadcast %cst_74 : f32 to vector<2x32xf32>
    %273 = arith.addf %272, %271 : vector<2x32xf32>
    %274 = arith.divf %272, %273 : vector<2x32xf32>
    %275 = arith.mulf %266, %243 : vector<2x32xf32>
    %276 = arith.mulf %260, %268 : vector<2x32xf32>
    %277 = arith.addf %275, %276 : vector<2x32xf32>
    %278 = math.tanh %277 : vector<2x32xf32>
    %279 = arith.mulf %274, %278 : vector<2x32xf32>
    %280 = arith.index_cast %c7_i32 : i32 to index
    %c0_75 = arith.constant 0 : index
    %c0_76 = arith.constant 0 : index
    %281 = vector.load %arg8[%280, %c0_75, %c0_76] : memref<8x2x32xf32, #tpu.memory_space<vmem>>, vector<1x2x32xf32>
    %282 = vector.shape_cast %281 : vector<1x2x32xf32> to vector<2x32xf32>
    %283 = vector.shape_cast %279 : vector<2x32xf32> to vector<1x2x32xf32>
    tpu.vector_store %arg8[%280, %c0_75, %c0_76], %283 {strides = array<i32>} : memref<8x2x32xf32, #tpu.memory_space<vmem>>, vector<1x2x32xf32>,
    %c8_i32 = arith.constant 8 : i32
    %c0_77 = arith.constant 0 : index
    %c0_78 = arith.constant 0 : index
    %c0_79 = arith.constant 0 : index
    %284 = vector.load %arg8[%c0_77, %c0_78, %c0_79] : memref<8x2x32xf32, #tpu.memory_space<vmem>>, vector<8x2x32xf32>
    %285 = vector.shape_cast %284 : vector<8x2x32xf32> to vector<16x32xf32>
    %c0_80 = arith.constant 0 : index
    %c0_81 = arith.constant 0 : index
    %286 = vector.load %arg4[%c0_80, %c0_81] : memref<32x8xf32, #tpu.memory_space<vmem>>, vector<32x8xf32>
    %cst_82 = arith.constant dense<0.000000e+00> : vector<16x8xf32>
    %287 = tpu.matmul %285, %286, %cst_82 {dimension_numbers = #tpu.dot_dimension_numbers<[1], [0], [0], [1], [0, 0, 1, 1], [], []>} : vector<16x32xf32>, vector<32x8xf32>, vector<16x8xf32> -> vector<16x8xf32>
    %c0_83 = arith.constant 0 : index
    %c0_84 = arith.constant 0 : index
    %288 = vector.load %arg5[%c0_83, %c0_84] : memref<1x8xf32, #tpu.memory_space<vmem>>, vector<1x8xf32>
    %289 = vector.broadcast %288 : vector<1x8xf32> to vector<16x8xf32>
    %290 = arith.addf %287, %289 : vector<16x8xf32>
    %291 = vector.shape_cast %290 : vector<16x8xf32> to vector<8x2x8xf32>
    %c0_85 = arith.constant 0 : index
    %c0_86 = arith.constant 0 : index
    %c0_87 = arith.constant 0 : index
    %292 = vector.load %arg6[%c0_85, %c0_86, %c0_87] : memref<8x2x8xf32, #tpu.memory_space<vmem>>, vector<8x2x8xf32>
    tpu.vector_store %arg6[%c0_85, %c0_86, %c0_87], %291 {strides = array<i32>} : memref<8x2x8xf32, #tpu.memory_space<vmem>>, vector<8x2x8xf32>,
    return
  }
}

</mosaic_0001>

<llo_original>
// kernel: tpu_custom_call.1
$region0: #{tpu_custom_call.1}
  #allocation0 [shape = 'u32[]', space=smem, size = 0x4, offset = 0x4, fixed_abs, tag = 'smem constant byte address 0x4 - core index']
  #allocation1 [shape = 'u32[72,128]{1,0:T(1,128)}', space=vmem, size = 0x9000, scoped, tag = 'internal scratch']
  #allocation2 [shape = 'f32[8,2,128]{2,1,0:T(2,128)}', space=vmem, size = 0x2000, scoped, tag = 'scratch operand']
  #allocation3 [shape = 'f32[8,2,32]{2,1,0:T(2,128)}', space=vmem, size = 0x2000, scoped, tag = 'scratch operand']
  %s0 = inlined_call_operand.vmem [shape: f32[8,2,4], index: 0, kind: input, shape index: {}]
  %s1 = inlined_call_operand.vmem [shape: f32[4,128], index: 1, kind: input, shape index: {}]
  %s2 = inlined_call_operand.vmem [shape: f32[32,128], index: 2, kind: input, shape index: {}]
  %s3 = inlined_call_operand.vmem [shape: f32[1,128], index: 3, kind: input, shape index: {}]
  %s4 = inlined_call_operand.vmem [shape: f32[32,8], index: 4, kind: input, shape index: {}]
  %s5 = inlined_call_operand.vmem [shape: f32[1,8], index: 5, kind: input, shape index: {}]
  %s6 = inlined_call_operand.hbm [shape: f32[8,2,8], index: 6, kind: output, shape index: {}]
  %s7 = sld [smem:[#allocation0]]
  $region34: #{tpu_custom_call.1} parent=0
    _
  %s9 = ssub.s32 1, %s7
  %s10 = scalar_select 0, %s9, %s7
  $region1: #{tpu_custom_call.1} parent=0
    #allocation4 [shape = 'u8[8192]{0}', space=vmem, size = 0x2000, scoped, tag = 'output window, operand 0, single buffered']
    #allocation5 [shape = 's32[1]{0}', space=sflag, size = 0x4, scoped, tag = 'scoped memory for tpu_custom_call.1']
    %11 = vsyncpa [#allocation5], 0
    // Predicated region
    $region2: #{tpu_custom_call.1} parent=1 // pred_check
      _
    $region3: #{tpu_custom_call.1} parent=1 // pred_check_branch
      %13 = sbr.rel (0) target = $region5
    $region4: #{tpu_custom_call.1} parent=1 // pred_region
      _
    $region5: #{tpu_custom_call.1} parent=1 // pred_fallthru
      _
    // Predicated region
    $region6: #{tpu_custom_call.1} parent=1 // pred_check
      _
    $region7: #{tpu_custom_call.1} parent=1 // pred_check_branch
      %15 = sbr.rel (0) target = $region9
    $region8: #{tpu_custom_call.1} parent=1 // pred_region
      _
    $region9: #{tpu_custom_call.1} parent=1 // pred_fallthru
      _
    // Predicated region
    $region10: #{tpu_custom_call.1} parent=1 // pred_check
      _
    $region11: #{tpu_custom_call.1} parent=1 // pred_check_branch
      %17 = sbr.rel (0) target = $region13
    $region12: #{tpu_custom_call.1} parent=1 // pred_region
      _
    $region13: #{tpu_custom_call.1} parent=1 // pred_fallthru
      _
    // Predicated region
    $region14: #{tpu_custom_call.1} parent=1 // pred_check
      _
    $region15: #{tpu_custom_call.1} parent=1 // pred_check_branch
      %19 = sbr.rel (0) target = $region17
    $region16: #{tpu_custom_call.1} parent=1 // pred_region
      _
    $region17: #{tpu_custom_call.1} parent=1 // pred_fallthru
      _
    // Predicated region
    $region18: #{tpu_custom_call.1} parent=1 // pred_check
      _
    $region19: #{tpu_custom_call.1} parent=1 // pred_check_branch
      %21 = sbr.rel (0) target = $region21
    $region20: #{tpu_custom_call.1} parent=1 // pred_region
      _
    $region21: #{tpu_custom_call.1} parent=1 // pred_fallthru
      _
    // Predicated region
    $region22: #{tpu_custom_call.1} parent=1 // pred_check
      _
    $region23: #{tpu_custom_call.1} parent=1 // pred_check_branch
      %23 = sbr.rel (0) target = $region25
    $region24: #{tpu_custom_call.1} parent=1 // pred_region
      _
    $region25: #{tpu_custom_call.1} parent=1 // pred_fallthru
      _
    %v24 = vld [vmem:[%s0] sm:$0x3]
    %v25 = vld [vmem:[%s0 + $0x2] sm:$0x3]
    %v26 = vld [vmem:[%s0 + $0x4] sm:$0x3]
    %v27 = vld [vmem:[%s0 + $0x6] sm:$0x3]
    %v28 = vld [vmem:[%s0 + $0x8] sm:$0x3]
    %v29 = vld [vmem:[%s0 + $0xa] sm:$0x3]
    %v30 = vld [vmem:[%s0 + $0xc] sm:$0x3]
    %v31 = vld [vmem:[%s0 + $0xe] sm:$0x3]
    %v32 = vld [vmem:[%s1] sm:$0xf]
    %v33 = vld [vmem:[%s3] sm:$0x1]
    %v35 = vperm.slane %v33, 0
    %45 = vst [vmem:[#allocation1] ss:$4 sm:$0xff] %v24
    %s46 = scalar_lea.vmem [#allocation1], 1
    %47 = vst [vmem:[%s46] ss:$4 sm:$0xff] %v25
    %s48 = scalar_lea.vmem [#allocation1], 2
    %49 = vst [vmem:[%s48] ss:$4 sm:$0xff] %v26
    %s50 = scalar_lea.vmem [#allocation1], 3
    %51 = vst [vmem:[%s50] ss:$4 sm:$0xff] %v27
    %s52 = scalar_lea.vmem [#allocation1], 32
    %53 = vst [vmem:[%s52] ss:$4 sm:$0xff] %v28
    %s54 = scalar_lea.vmem [#allocation1], 33
    %55 = vst [vmem:[%s54] ss:$4 sm:$0xff] %v29
    %s56 = scalar_lea.vmem [#allocation1], 34
    %57 = vst [vmem:[%s56] ss:$4 sm:$0xff] %v30
    %s58 = scalar_lea.vmem [#allocation1], 35
    %59 = vst [vmem:[%s58] ss:$4 sm:$0xff] %v31
    %v60 = vld.sshfl [vmem:[#allocation1] sm:$0xff pattern:$0x73625140]
    %v61 = vld.sshfl [vmem:[#allocation1 + $0x20] sm:$0xff pattern:$0x73625140]
    %vm62 = vcmask 31744
    %v63 = vsel %vm62, %v60, 0
    %v65 = vsel %vm62, %v61, 0
    %vm67 = vcmask 1043456
    %v69 = vsel %vm67, %v32, 0
    %71 = vmatpush.msra.mxu0 0.0
    %72 = vmatpush.msra.mxu0 0.0
    %73 = vmatpush.msra.mxu0 0.0
    %74 = vmatpush.msra.mxu0 0.0
    %75 = vmatpush.msra.mxu0 0.0
    %76 = vmatpush.msra.mxu0 0.0
    %77 = vmatpush.msra.mxu0 0.0
    %78 = vmatpush.msra.mxu0 0.0
    %79 = vmatpush.msra.mxu0 0.0
    %80 = vmatpush.msra.mxu0 0.0
    %81 = vmatpush.msra.mxu0 0.0
    %82 = vmatpush.msra.mxu0 0.0
    %83 = vmatpush.msra.mxu0 0.0
    %84 = vmatpush.msra.mxu0 0.0
    %85 = vmatpush.msra.mxu0 0.0
    %86 = vmatpush.msra.mxu0 %v69
    %87 = vmatmul.f32.gmra.mxu0 %v63
    %v88 = vpop.f32.mrf.mxu0
    %v89 = vadd.f32 %v35, %v88
    %90 = vmatmul.f32.gmra.mxu0 %v65
    %v91 = vpop.f32.mrf.mxu0
    %v92 = vadd.f32 %v35, %v91
    %93 = vdwg.mxu0
    %v96 = vrot.slane %v89, 2
    %v97 = vrot.slane %v89, 4
    %v98 = vrot.slane %v89, 6
    %v99 = vrot.slane %v92, 2
    %v100 = vrot.slane %v92, 4
    %v101 = vrot.slane %v92, 6
    %108 = vst [vmem:[#allocation2] sm:$0x3] %v89
    %109 = vst [vmem:[#allocation2 + $0x2] sm:$0x3] %v96
    %110 = vst [vmem:[#allocation2 + $0x4] sm:$0x3] %v97
    %111 = vst [vmem:[#allocation2 + $0x6] sm:$0x3] %v98
    %112 = vst [vmem:[#allocation2 + $0x8] sm:$0x3] %v92
    %113 = vst [vmem:[#allocation2 + $0xa] sm:$0x3] %v99
    %114 = vst [vmem:[#allocation2 + $0xc] sm:$0x3] %v100
    %115 = vst [vmem:[#allocation2 + $0xe] sm:$0x3] %v101
    %v116 = vld [vmem:[%s2] sm:$0xff]
    %v117 = vld [vmem:[%s2 + $0x8] sm:$0xff]
    %v118 = vld [vmem:[%s2 + $0x10] sm:$0xff]
    %v119 = vld [vmem:[%s2 + $0x18] sm:$0xff]
    %v120 = vld [vmem:[#allocation2] sm:$0x3]
    %vm121 = vcmask 261120
    %v123 = vsel %vm121, 0.0, 0
    %125 = vmatpush.msra.mxu0 0.0
    %126 = vmatpush.msra.mxu0 0.0
    %127 = vmatpush.msra.mxu0 0.0
    %128 = vmatpush.msra.mxu0 0.0
    %129 = vmatpush.msra.mxu0 0.0
    %130 = vmatpush.msra.mxu0 0.0
    %131 = vmatpush.msra.mxu0 0.0
    %132 = vmatpush.msra.mxu0 0.0
    %133 = vmatpush.msra.mxu0 0.0
    %134 = vmatpush.msra.mxu0 0.0
    %135 = vmatpush.msra.mxu0 0.0
    %136 = vmatpush.msra.mxu0 0.0
    %137 = vmatpush.msra.mxu0 %v119
    %138 = vmatpush.msra.mxu0 %v118
    %139 = vmatpush.msra.mxu0 %v117
    %140 = vmatpush.msra.mxu0 %v116
    %141 = vmatmul.f32.gmra.mxu0 %v123
    %v142 = vpop.f32.mrf.mxu0
    %v143 = vadd.f32 0.0, %v142
    %144 = vdwg.mxu0
    %v145 = vadd.f32 %v120, %v143
    %v146 = vxor.u32 %v145, 2147483648
    %v147 = vmul.f32 %v146, 1.442695
    %v148 = vpow.pop %v147
    %v149 = vadd.f32 %v148, 1.0
    %v150 = vrcp.pop %v149
    %v151 = vmul.f32 %v149, %v150
    %v152 = vsub.f32 1.0, %v151
    %v153 = vmul.f32 %v150, %v152
    %v154 = vadd.f32 %v150, %v153
    %vm155 = vweird.f32 %v149
    %vm156 = vweird.f32 %v150
    %vm157 = vmor %vm155, %vm156
    %v158 = vsel %vm157, %v150, %v154
    %v159 = vand.u32 2147483647, %v149
    %vm160 = vcmp.eq.f32.partialorder %v159, 8.507059e+37
    %v161 = vand.u32 %v149, 2147483648
    %v162 = vor.u32 1.1754944e-38, %v161
    %v163 = vsel %vm160, %v162, %v158
    %v164 = vmul.f32 1.0, %v163
    %v165 = vtanh.pop %v145
    %v166 = vmul.f32 %v164, 0.0
    %168 = vrot.lane.b32.xlu0 %v165, 64
    %v169 = vpop.permute.xlu0 %168
    %v171 = vmul.f32 %v164, %v169
    %173 = vrot.lane.b32.xlu0 %v171, 32
    %v174 = vpop.permute.xlu0 %173
    %v176 = vadd.f32 %v166, %v174
    %v177 = vtanh.pop %v176
    %179 = vrot.lane.b32.xlu0 %v177, 64
    %v180 = vpop.permute.xlu0 %179
    %v182 = vmul.f32 %v164, %v180
    %184 = vrot.lane.b32.xlu0 %v182, 32
    %v185 = vpop.permute.xlu0 %184
    %vm187 = vcmask 254976
    %188 = vst.msk [vmem:[#allocation3] sm:$0x3] %vm187, %v185
    %s189 = scalar_lea.vmem [#allocation2], 2
    %v190 = vld [vmem:[%s189] sm:$0x3]
    %v191 = vsel %vm121, %v185, 0
    %193 = vmatpush.msra.mxu0 0.0
    %194 = vmatpush.msra.mxu0 0.0
    %195 = vmatpush.msra.mxu0 0.0
    %196 = vmatpush.msra.mxu0 0.0
    %197 = vmatpush.msra.mxu0 0.0
    %198 = vmatpush.msra.mxu0 0.0
    %199 = vmatpush.msra.mxu0 0.0
    %200 = vmatpush.msra.mxu0 0.0
    %201 = vmatpush.msra.mxu0 0.0
    %202 = vmatpush.msra.mxu0 0.0
    %203 = vmatpush.msra.mxu0 0.0
    %204 = vmatpush.msra.mxu0 0.0
    %205 = vmatpush.msra.mxu0 %v119
    %206 = vmatpush.msra.mxu0 %v118
    %207 = vmatpush.msra.mxu0 %v117
    %208 = vmatpush.msra.mxu0 %v116
    %209 = vmatmul.f32.gmra.mxu0 %v191
    %v210 = vpop.f32.mrf.mxu0
    %v211 = vadd.f32 0.0, %v210
    %212 = vdwg.mxu0
    %v213 = vadd.f32 %v190, %v211
    %v214 = vxor.u32 %v213, 2147483648
    %v215 = vmul.f32 %v214, 1.442695
    %v216 = vpow.pop %v215
    %v217 = vadd.f32 %v216, 1.0
    %v218 = vrcp.pop %v217
    %v219 = vmul.f32 %v217, %v218
    %v220 = vsub.f32 1.0, %v219
    %v221 = vmul.f32 %v218, %v220
    %v222 = vadd.f32 %v218, %v221
    %vm223 = vweird.f32 %v217
    %vm224 = vweird.f32 %v218
    %vm225 = vmor %vm223, %vm224
    %v226 = vsel %vm225, %v218, %v222
    %v227 = vand.u32 2147483647, %v217
    %vm228 = vcmp.eq.f32.partialorder %v227, 8.507059e+37
    %v229 = vand.u32 %v217, 2147483648
    %v230 = vor.u32 1.1754944e-38, %v229
    %v231 = vsel %vm228, %v230, %v226
    %v232 = vmul.f32 1.0, %v231
    %v233 = vtanh.pop %v213
    %v234 = vmul.f32 %v232, %v176
    %236 = vrot.lane.b32.xlu0 %v233, 64
    %v237 = vpop.permute.xlu0 %236
    %v239 = vmul.f32 %v232, %v237
    %241 = vrot.lane.b32.xlu0 %v239, 32
    %v242 = vpop.permute.xlu0 %241
    %v244 = vadd.f32 %v234, %v242
    %v245 = vtanh.pop %v244
    %247 = vrot.lane.b32.xlu0 %v245, 64
    %v248 = vpop.permute.xlu0 %247
    %v250 = vmul.f32 %v232, %v248
    %252 = vrot.lane.b32.xlu0 %v250, 32
    %v253 = vpop.permute.xlu0 %252
    %s255 = scalar_lea.vmem [#allocation3], 2
    %256 = vst.msk [vmem:[%s255] sm:$0x3] %vm187, %v253
    %s257 = scalar_lea.vmem [#allocation2], 4
    %v258 = vld [vmem:[%s257] sm:$0x3]
    %v259 = vsel %vm121, %v253, 0
    %261 = vmatpush.msra.mxu0 0.0
    %262 = vmatpush.msra.mxu0 0.0
    %263 = vmatpush.msra.mxu0 0.0
    %264 = vmatpush.msra.mxu0 0.0
    %265 = vmatpush.msra.mxu0 0.0
    %266 = vmatpush.msra.mxu0 0.0
    %267 = vmatpush.msra.mxu0 0.0
    %268 = vmatpush.msra.mxu0 0.0
    %269 = vmatpush.msra.mxu0 0.0
    %270 = vmatpush.msra.mxu0 0.0
    %271 = vmatpush.msra.mxu0 0.0
    %272 = vmatpush.msra.mxu0 0.0
    %273 = vmatpush.msra.mxu0 %v119
    %274 = vmatpush.msra.mxu0 %v118
    %275 = vmatpush.msra.mxu0 %v117
    %276 = vmatpush.msra.mxu0 %v116
    %277 = vmatmul.f32.gmra.mxu0 %v259
    %v278 = vpop.f32.mrf.mxu0
    %v279 = vadd.f32 0.0, %v278
    %280 = vdwg.mxu0
    %v281 = vadd.f32 %v258, %v279
    %v282 = vxor.u32 %v281, 2147483648
    %v283 = vmul.f32 %v282, 1.442695
    %v284 = vpow.pop %v283
    %v285 = vadd.f32 %v284, 1.0
    %v286 = vrcp.pop %v285
    %v287 = vmul.f32 %v285, %v286
    %v288 = vsub.f32 1.0, %v287
    %v289 = vmul.f32 %v286, %v288
    %v290 = vadd.f32 %v286, %v289
    %vm291 = vweird.f32 %v285
    %vm292 = vweird.f32 %v286
    %vm293 = vmor %vm291, %vm292
    %v294 = vsel %vm293, %v286, %v290
    %v295 = vand.u32 2147483647, %v285
    %vm296 = vcmp.eq.f32.partialorder %v295, 8.507059e+37
    %v297 = vand.u32 %v285, 2147483648
    %v298 = vor.u32 1.1754944e-38, %v297
    %v299 = vsel %vm296, %v298, %v294
    %v300 = vmul.f32 1.0, %v299
    %v301 = vtanh.pop %v281
    %v302 = vmul.f32 %v300, %v244
    %304 = vrot.lane.b32.xlu0 %v301, 64
    %v305 = vpop.permute.xlu0 %304
    %v307 = vmul.f32 %v300, %v305
    %309 = vrot.lane.b32.xlu0 %v307, 32
    %v310 = vpop.permute.xlu0 %309
    %v312 = vadd.f32 %v302, %v310
    %v313 = vtanh.pop %v312
    %315 = vrot.lane.b32.xlu0 %v313, 64
    %v316 = vpop.permute.xlu0 %315
    %v318 = vmul.f32 %v300, %v316
    %320 = vrot.lane.b32.xlu0 %v318, 32
    %v321 = vpop.permute.xlu0 %320
    %s323 = scalar_lea.vmem [#allocation3], 4
    %324 = vst.msk [vmem:[%s323] sm:$0x3] %vm187, %v321
    %s325 = scalar_lea.vmem [#allocation2], 6
    %v326 = vld [vmem:[%s325] sm:$0x3]
    %v327 = vsel %vm121, %v321, 0
    %329 = vmatpush.msra.mxu0 0.0
    %330 = vmatpush.msra.mxu0 0.0
    %331 = vmatpush.msra.mxu0 0.0
    %332 = vmatpush.msra.mxu0 0.0
    %333 = vmatpush.msra.mxu0 0.0
    %334 = vmatpush.msra.mxu0 0.0
    %335 = vmatpush.msra.mxu0 0.0
    %336 = vmatpush.msra.mxu0 0.0
    %337 = vmatpush.msra.mxu0 0.0
    %338 = vmatpush.msra.mxu0 0.0
    %339 = vmatpush.msra.mxu0 0.0
    %340 = vmatpush.msra.mxu0 0.0
    %341 = vmatpush.msra.mxu0 %v119
    %342 = vmatpush.msra.mxu0 %v118
    %343 = vmatpush.msra.mxu0 %v117
    %344 = vmatpush.msra.mxu0 %v116
    %345 = vmatmul.f32.gmra.mxu0 %v327
    %v346 = vpop.f32.mrf.mxu0
    %v347 = vadd.f32 0.0, %v346
    %348 = vdwg.mxu0
    %v349 = vadd.f32 %v326, %v347
    %v350 = vxor.u32 %v349, 2147483648
    %v351 = vmul.f32 %v350, 1.442695
    %v352 = vpow.pop %v351
    %v353 = vadd.f32 %v352, 1.0
    %v354 = vrcp.pop %v353
    %v355 = vmul.f32 %v353, %v354
    %v356 = vsub.f32 1.0, %v355
    %v357 = vmul.f32 %v354, %v356
    %v358 = vadd.f32 %v354, %v357
    %vm359 = vweird.f32 %v353
    %vm360 = vweird.f32 %v354
    %vm361 = vmor %vm359, %vm360
    %v362 = vsel %vm361, %v354, %v358
    %v363 = vand.u32 2147483647, %v353
    %vm364 = vcmp.eq.f32.partialorder %v363, 8.507059e+37
    %v365 = vand.u32 %v353, 2147483648
    %v366 = vor.u32 1.1754944e-38, %v365
    %v367 = vsel %vm364, %v366, %v362
    %v368 = vmul.f32 1.0, %v367
    %v369 = vtanh.pop %v349
    %v370 = vmul.f32 %v368, %v312
    %372 = vrot.lane.b32.xlu0 %v369, 64
    %v373 = vpop.permute.xlu0 %372
    %v375 = vmul.f32 %v368, %v373
    %377 = vrot.lane.b32.xlu0 %v375, 32
    %v378 = vpop.permute.xlu0 %377
    %v380 = vadd.f32 %v370, %v378
    %v381 = vtanh.pop %v380
    %383 = vrot.lane.b32.xlu0 %v381, 64
    %v384 = vpop.permute.xlu0 %383
    %v386 = vmul.f32 %v368, %v384
    %388 = vrot.lane.b32.xlu0 %v386, 32
    %v389 = vpop.permute.xlu0 %388
    %s391 = scalar_lea.vmem [#allocation3], 6
    %392 = vst.msk [vmem:[%s391] sm:$0x3] %vm187, %v389
    %s393 = scalar_lea.vmem [#allocation2], 8
    %v394 = vld [vmem:[%s393] sm:$0x3]
    %v395 = vsel %vm121, %v389, 0
    %397 = vmatpush.msra.mxu0 0.0
    %398 = vmatpush.msra.mxu0 0.0
    %399 = vmatpush.msra.mxu0 0.0
    %400 = vmatpush.msra.mxu0 0.0
    %401 = vmatpush.msra.mxu0 0.0
    %402 = vmatpush.msra.mxu0 0.0
    %403 = vmatpush.msra.mxu0 0.0
    %404 = vmatpush.msra.mxu0 0.0
    %405 = vmatpush.msra.mxu0 0.0
    %406 = vmatpush.msra.mxu0 0.0
    %407 = vmatpush.msra.mxu0 0.0
    %408 = vmatpush.msra.mxu0 0.0
    %409 = vmatpush.msra.mxu0 %v119
    %410 = vmatpush.msra.mxu0 %v118
    %411 = vmatpush.msra.mxu0 %v117
    %412 = vmatpush.msra.mxu0 %v116
    %413 = vmatmul.f32.gmra.mxu0 %v395
    %v414 = vpop.f32.mrf.mxu0
    %v415 = vadd.f32 0.0, %v414
    %416 = vdwg.mxu0
    %v417 = vadd.f32 %v394, %v415
    %v418 = vxor.u32 %v417, 2147483648
    %v419 = vmul.f32 %v418, 1.442695
    %v420 = vpow.pop %v419
    %v421 = vadd.f32 %v420, 1.0
    %v422 = vrcp.pop %v421
    %v423 = vmul.f32 %v421, %v422
    %v424 = vsub.f32 1.0, %v423
    %v425 = vmul.f32 %v422, %v424
    %v426 = vadd.f32 %v422, %v425
    %vm427 = vweird.f32 %v421
    %vm428 = vweird.f32 %v422
    %vm429 = vmor %vm427, %vm428
    %v430 = vsel %vm429, %v422, %v426
    %v431 = vand.u32 2147483647, %v421
    %vm432 = vcmp.eq.f32.partialorder %v431, 8.507059e+37
    %v433 = vand.u32 %v421, 2147483648
    %v434 = vor.u32 1.1754944e-38, %v433
    %v435 = vsel %vm432, %v434, %v430
    %v436 = vmul.f32 1.0, %v435
    %v437 = vtanh.pop %v417
    %v438 = vmul.f32 %v436, %v380
    %440 = vrot.lane.b32.xlu0 %v437, 64
    %v441 = vpop.permute.xlu0 %440
    %v443 = vmul.f32 %v436, %v441
    %445 = vrot.lane.b32.xlu0 %v443, 32
    %v446 = vpop.permute.xlu0 %445
    %v448 = vadd.f32 %v438, %v446
    %v449 = vtanh.pop %v448
    %451 = vrot.lane.b32.xlu0 %v449, 64
    %v452 = vpop.permute.xlu0 %451
    %v454 = vmul.f32 %v436, %v452
    %456 = vrot.lane.b32.xlu0 %v454, 32
    %v457 = vpop.permute.xlu0 %456
    %s459 = scalar_lea.vmem [#allocation3], 8
    %460 = vst.msk [vmem:[%s459] sm:$0x3] %vm187, %v457
    %s461 = scalar_lea.vmem [#allocation2], 10
    %v462 = vld [vmem:[%s461] sm:$0x3]
    %v463 = vsel %vm121, %v457, 0
    %465 = vmatpush.msra.mxu0 0.0
    %466 = vmatpush.msra.mxu0 0.0
    %467 = vmatpush.msra.mxu0 0.0
    %468 = vmatpush.msra.mxu0 0.0
    %469 = vmatpush.msra.mxu0 0.0
    %470 = vmatpush.msra.mxu0 0.0
    %471 = vmatpush.msra.mxu0 0.0
    %472 = vmatpush.msra.mxu0 0.0
    %473 = vmatpush.msra.mxu0 0.0
    %474 = vmatpush.msra.mxu0 0.0
    %475 = vmatpush.msra.mxu0 0.0
    %476 = vmatpush.msra.mxu0 0.0
    %477 = vmatpush.msra.mxu0 %v119
    %478 = vmatpush.msra.mxu0 %v118
    %479 = vmatpush.msra.mxu0 %v117
    %480 = vmatpush.msra.mxu0 %v116
    %481 = vmatmul.f32.gmra.mxu0 %v463
    %v482 = vpop.f32.mrf.mxu0
    %v483 = vadd.f32 0.0, %v482
    %484 = vdwg.mxu0
    %v485 = vadd.f32 %v462, %v483
    %v486 = vxor.u32 %v485, 2147483648
    %v487 = vmul.f32 %v486, 1.442695
    %v488 = vpow.pop %v487
    %v489 = vadd.f32 %v488, 1.0
    %v490 = vrcp.pop %v489
    %v491 = vmul.f32 %v489, %v490
    %v492 = vsub.f32 1.0, %v491
    %v493 = vmul.f32 %v490, %v492
    %v494 = vadd.f32 %v490, %v493
    %vm495 = vweird.f32 %v489
    %vm496 = vweird.f32 %v490
    %vm497 = vmor %vm495, %vm496
    %v498 = vsel %vm497, %v490, %v494
    %v499 = vand.u32 2147483647, %v489
    %vm500 = vcmp.eq.f32.partialorder %v499, 8.507059e+37
    %v501 = vand.u32 %v489, 2147483648
    %v502 = vor.u32 1.1754944e-38, %v501
    %v503 = vsel %vm500, %v502, %v498
    %v504 = vmul.f32 1.0, %v503
    %v505 = vtanh.pop %v485
    %v506 = vmul.f32 %v504, %v448
    %508 = vrot.lane.b32.xlu0 %v505, 64
    %v509 = vpop.permute.xlu0 %508
    %v511 = vmul.f32 %v504, %v509
    %513 = vrot.lane.b32.xlu0 %v511, 32
    %v514 = vpop.permute.xlu0 %513
    %v516 = vadd.f32 %v506, %v514
    %v517 = vtanh.pop %v516
    %519 = vrot.lane.b32.xlu0 %v517, 64
    %v520 = vpop.permute.xlu0 %519
    %v522 = vmul.f32 %v504, %v520
    %524 = vrot.lane.b32.xlu0 %v522, 32
    %v525 = vpop.permute.xlu0 %524
    %s527 = scalar_lea.vmem [#allocation3], 10
    %528 = vst.msk [vmem:[%s527] sm:$0x3] %vm187, %v525
    %s529 = scalar_lea.vmem [#allocation2], 12
    %v530 = vld [vmem:[%s529] sm:$0x3]
    %v531 = vsel %vm121, %v525, 0
    %533 = vmatpush.msra.mxu0 0.0
    %534 = vmatpush.msra.mxu0 0.0
    %535 = vmatpush.msra.mxu0 0.0
    %536 = vmatpush.msra.mxu0 0.0
    %537 = vmatpush.msra.mxu0 0.0
    %538 = vmatpush.msra.mxu0 0.0
    %539 = vmatpush.msra.mxu0 0.0
    %540 = vmatpush.msra.mxu0 0.0
    %541 = vmatpush.msra.mxu0 0.0
    %542 = vmatpush.msra.mxu0 0.0
    %543 = vmatpush.msra.mxu0 0.0
    %544 = vmatpush.msra.mxu0 0.0
    %545 = vmatpush.msra.mxu0 %v119
    %546 = vmatpush.msra.mxu0 %v118
    %547 = vmatpush.msra.mxu0 %v117
    %548 = vmatpush.msra.mxu0 %v116
    %549 = vmatmul.f32.gmra.mxu0 %v531
    %v550 = vpop.f32.mrf.mxu0
    %v551 = vadd.f32 0.0, %v550
    %552 = vdwg.mxu0
    %v553 = vadd.f32 %v530, %v551
    %v554 = vxor.u32 %v553, 2147483648
    %v555 = vmul.f32 %v554, 1.442695
    %v556 = vpow.pop %v555
    %v557 = vadd.f32 %v556, 1.0
    %v558 = vrcp.pop %v557
    %v559 = vmul.f32 %v557, %v558
    %v560 = vsub.f32 1.0, %v559
    %v561 = vmul.f32 %v558, %v560
    %v562 = vadd.f32 %v558, %v561
    %vm563 = vweird.f32 %v557
    %vm564 = vweird.f32 %v558
    %vm565 = vmor %vm563, %vm564
    %v566 = vsel %vm565, %v558, %v562
    %v567 = vand.u32 2147483647, %v557
    %vm568 = vcmp.eq.f32.partialorder %v567, 8.507059e+37
    %v569 = vand.u32 %v557, 2147483648
    %v570 = vor.u32 1.1754944e-38, %v569
    %v571 = vsel %vm568, %v570, %v566
    %v572 = vmul.f32 1.0, %v571
    %v573 = vtanh.pop %v553
    %v574 = vmul.f32 %v572, %v516
    %576 = vrot.lane.b32.xlu0 %v573, 64
    %v577 = vpop.permute.xlu0 %576
    %v579 = vmul.f32 %v572, %v577
    %581 = vrot.lane.b32.xlu0 %v579, 32
    %v582 = vpop.permute.xlu0 %581
    %v584 = vadd.f32 %v574, %v582
    %v585 = vtanh.pop %v584
    %587 = vrot.lane.b32.xlu0 %v585, 64
    %v588 = vpop.permute.xlu0 %587
    %v590 = vmul.f32 %v572, %v588
    %592 = vrot.lane.b32.xlu0 %v590, 32
    %v593 = vpop.permute.xlu0 %592
    %s595 = scalar_lea.vmem [#allocation3], 12
    %596 = vst.msk [vmem:[%s595] sm:$0x3] %vm187, %v593
    %s597 = scalar_lea.vmem [#allocation2], 14
    %v598 = vld [vmem:[%s597] sm:$0x3]
    %v599 = vsel %vm121, %v593, 0
    %601 = vmatpush.msra.mxu0 0.0
    %602 = vmatpush.msra.mxu0 0.0
    %603 = vmatpush.msra.mxu0 0.0
    %604 = vmatpush.msra.mxu0 0.0
    %605 = vmatpush.msra.mxu0 0.0
    %606 = vmatpush.msra.mxu0 0.0
    %607 = vmatpush.msra.mxu0 0.0
    %608 = vmatpush.msra.mxu0 0.0
    %609 = vmatpush.msra.mxu0 0.0
    %610 = vmatpush.msra.mxu0 0.0
    %611 = vmatpush.msra.mxu0 0.0
    %612 = vmatpush.msra.mxu0 0.0
    %613 = vmatpush.msra.mxu0 %v119
    %614 = vmatpush.msra.mxu0 %v118
    %615 = vmatpush.msra.mxu0 %v117
    %616 = vmatpush.msra.mxu0 %v116
    %617 = vmatmul.f32.gmra.mxu0 %v599
    %v618 = vpop.f32.mrf.mxu0
    %v619 = vadd.f32 0.0, %v618
    %620 = vdwg.mxu0
    %v621 = vadd.f32 %v598, %v619
    %v622 = vxor.u32 %v621, 2147483648
    %v623 = vmul.f32 %v622, 1.442695
    %v624 = vpow.pop %v623
    %v625 = vadd.f32 %v624, 1.0
    %v626 = vrcp.pop %v625
    %v627 = vmul.f32 %v625, %v626
    %v628 = vsub.f32 1.0, %v627
    %v629 = vmul.f32 %v626, %v628
    %v630 = vadd.f32 %v626, %v629
    %vm631 = vweird.f32 %v625
    %vm632 = vweird.f32 %v626
    %vm633 = vmor %vm631, %vm632
    %v634 = vsel %vm633, %v626, %v630
    %v635 = vand.u32 2147483647, %v625
    %vm636 = vcmp.eq.f32.partialorder %v635, 8.507059e+37
    %v637 = vand.u32 %v625, 2147483648
    %v638 = vor.u32 1.1754944e-38, %v637
    %v639 = vsel %vm636, %v638, %v634
    %v640 = vmul.f32 1.0, %v639
    %v641 = vtanh.pop %v621
    %v642 = vmul.f32 %v640, %v584
    %644 = vrot.lane.b32.xlu0 %v641, 64
    %v645 = vpop.permute.xlu0 %644
    %v647 = vmul.f32 %v640, %v645
    %649 = vrot.lane.b32.xlu0 %v647, 32
    %v650 = vpop.permute.xlu0 %649
    %v652 = vadd.f32 %v642, %v650
    %v653 = vtanh.pop %v652
    %655 = vrot.lane.b32.xlu0 %v653, 64
    %v656 = vpop.permute.xlu0 %655
    %v658 = vmul.f32 %v640, %v656
    %660 = vrot.lane.b32.xlu0 %v658, 32
    %v661 = vpop.permute.xlu0 %660
    %s663 = scalar_lea.vmem [#allocation3], 14
    %664 = vst.msk [vmem:[%s663] sm:$0x3] %vm187, %v661
    %v665 = vld [vmem:[#allocation3] sm:$0x3]
    %v666 = vld [vmem:[#allocation3 + $0x2] sm:$0x3]
    %v667 = vld [vmem:[#allocation3 + $0x4] sm:$0x3]
    %v668 = vld [vmem:[#allocation3 + $0x6] sm:$0x3]
    %v669 = vld [vmem:[#allocation3 + $0x8] sm:$0x3]
    %v670 = vld [vmem:[#allocation3 + $0xa] sm:$0x3]
    %v671 = vld [vmem:[#allocation3 + $0xc] sm:$0x3]
    %v672 = vld [vmem:[#allocation3 + $0xe] sm:$0x3]
    %v673 = vld [vmem:[%s4] sm:$0xff]
    %v674 = vld [vmem:[%s4 + $0x8] sm:$0xff]
    %v675 = vld [vmem:[%s4 + $0x10] sm:$0xff]
    %v676 = vld [vmem:[%s4 + $0x18] sm:$0xff]
    %v677 = vld [vmem:[%s5] sm:$0x1]
    %v679 = vperm.slane %v677, 0
    %689 = vst [vmem:[#allocation1] ss:$4 sm:$0xff] %v665
    %s690 = scalar_lea.vmem [#allocation1], 1
    %691 = vst [vmem:[%s690] ss:$4 sm:$0xff] %v666
    %s692 = scalar_lea.vmem [#allocation1], 2
    %693 = vst [vmem:[%s692] ss:$4 sm:$0xff] %v667
    %s694 = scalar_lea.vmem [#allocation1], 3
    %695 = vst [vmem:[%s694] ss:$4 sm:$0xff] %v668
    %s696 = scalar_lea.vmem [#allocation1], 32
    %697 = vst [vmem:[%s696] ss:$4 sm:$0xff] %v669
    %s698 = scalar_lea.vmem [#allocation1], 33
    %699 = vst [vmem:[%s698] ss:$4 sm:$0xff] %v670
    %s700 = scalar_lea.vmem [#allocation1], 34
    %701 = vst [vmem:[%s700] ss:$4 sm:$0xff] %v671
    %s702 = scalar_lea.vmem [#allocation1], 35
    %703 = vst [vmem:[%s702] ss:$4 sm:$0xff] %v672
    %v704 = vld.sshfl [vmem:[#allocation1] sm:$0xff pattern:$0x73625140]
    %v705 = vld.sshfl [vmem:[#allocation1 + $0x20] sm:$0xff pattern:$0x73625140]
    %v706 = vsel %vm121, %v704, 0
    %v708 = vsel %vm121, %v705, 0
    %710 = vmatpush.msra.mxu0 0.0
    %711 = vmatpush.msra.mxu0 0.0
    %712 = vmatpush.msra.mxu0 0.0
    %713 = vmatpush.msra.mxu0 0.0
    %714 = vmatpush.msra.mxu0 0.0
    %715 = vmatpush.msra.mxu0 0.0
    %716 = vmatpush.msra.mxu0 0.0
    %717 = vmatpush.msra.mxu0 0.0
    %718 = vmatpush.msra.mxu0 0.0
    %719 = vmatpush.msra.mxu0 0.0
    %720 = vmatpush.msra.mxu0 0.0
    %721 = vmatpush.msra.mxu0 0.0
    %722 = vmatpush.msra.mxu0 %v676
    %723 = vmatpush.msra.mxu0 %v675
    %724 = vmatpush.msra.mxu0 %v674
    %725 = vmatpush.msra.mxu0 %v673
    %726 = vmatmul.f32.gmra.mxu0 %v706
    %v727 = vpop.f32.mrf.mxu0
    %v728 = vadd.f32 %v679, %v727
    %729 = vmatmul.f32.gmra.mxu0 %v708
    %v730 = vpop.f32.mrf.mxu0
    %v731 = vadd.f32 %v679, %v730
    %732 = vdwg.mxu0
    %v735 = vrot.slane %v728, 2
    %v736 = vrot.slane %v728, 4
    %v737 = vrot.slane %v728, 6
    %v738 = vrot.slane %v731, 2
    %v739 = vrot.slane %v731, 4
    %v740 = vrot.slane %v731, 6
    %vm747 = vcmask 58368
    %748 = vst.msk [vmem:[#allocation4] sm:$0x3] %vm747, %v728
    %749 = vst.msk [vmem:[#allocation4 + $0x2] sm:$0x3] %vm747, %v735
    %750 = vst.msk [vmem:[#allocation4 + $0x4] sm:$0x3] %vm747, %v736
    %751 = vst.msk [vmem:[#allocation4 + $0x6] sm:$0x3] %vm747, %v737
    %752 = vst.msk [vmem:[#allocation4 + $0x8] sm:$0x3] %vm747, %v731
    %753 = vst.msk [vmem:[#allocation4 + $0xa] sm:$0x3] %vm747, %v738
    %754 = vst.msk [vmem:[#allocation4 + $0xc] sm:$0x3] %vm747, %v739
    %755 = vst.msk [vmem:[#allocation4 + $0xe] sm:$0x3] %vm747, %v740
    // Predicated region
    $region26: #{tpu_custom_call.1} parent=1 // pred_check
      _
    $region27: #{tpu_custom_call.1} parent=1 // pred_check_branch
      %757 = sbr.rel (0) target = $region29
    $region28: #{tpu_custom_call.1} parent=1 // pred_region
      %759 = vsyncadd [#allocation5], 0
      %s760 = sshll.u32 [#allocation4], 4
      %s761 = int_to_ptr.vmem [resolvable:$true] %s760
      %s762 = sshll.u32 %s6, 4
      %s763 = int_to_ptr.hbm [resolvable:$true] %s762
      %768 = dma.vmem_to_hbm [thread:$0]  %s761, 256, %s763, [#allocation5], 32, 32, 2
    $region29: #{tpu_custom_call.1} parent=1 // pred_fallthru
      _
    // Predicated region
    $region30: #{tpu_custom_call.1} parent=1 // pred_check
      _
    $region31: #{tpu_custom_call.1} parent=1 // pred_check_branch
      %770 = sbr.rel (0) target = $region33
    $region32: #{tpu_custom_call.1} parent=1 // pred_region
      %772 = dma.done [#allocation5], 256
    $region33: #{tpu_custom_call.1} parent=1 // pred_fallthru
      _
    %773 = vsyncpa [#allocation5], 1

</llo_original>
